<compile_context>
chip_gen: v6e
topology: v6e:2x2x1
jax: 0.10.0
libtpu: 0.0.40
codegen_flags: <defaults>
</compile_context>

<pallas_src>
import math

import jax
import jax.numpy as jnp
from jax.experimental import pallas as pl
from jax.experimental.pallas import tpu as pltpu


# ----------------------------------------------------------------------------
# generation-aware VMEM budget
# ----------------------------------------------------------------------------
def _vmem_capacity_bytes():
    try:
        info = pltpu.get_tpu_info()
        cap = getattr(info, "vmem_capacity_bytes", None)
        if cap:
            return int(cap)
    except Exception:
        pass
    return 64 << 20  # conservative (v7x-sized) fallback


_VMEM_CAP = _vmem_capacity_bytes()
# ~96 MiB on 128-MiB v5e/v6e, ~48 MiB on 64-MiB v7x.
_VMEM_LIMIT = max(32 << 20, min((_VMEM_CAP * 3) // 4, 96 << 20))


# ----------------------------------------------------------------------------
# small helpers
# ----------------------------------------------------------------------------
def _round_up(x, m):
    return ((x + m - 1) // m) * m


def _pad_rows(x, rows):
    if x.shape[0] == rows:
        return x
    return jnp.pad(x, ((0, rows - x.shape[0]), (0, 0)))


def _const_spec(shape):
    """Weight operand: constant block index -> keep a single VMEM buffer."""
    return pl.BlockSpec(shape, lambda i: (0,) * len(shape),
                        pipeline_mode=pl.Buffered(1))


# ----------------------------------------------------------------------------
# kernel bodies
# ----------------------------------------------------------------------------
def _linear_kernel(x_ref, w_ref, o_ref):
    o_ref[...] = jnp.dot(
        x_ref[...], w_ref[...], preferred_element_type=jnp.float32
    ).astype(o_ref.dtype)


def _fused_mlp_packed_kernel(c_ref, t_ref, w1_ref, w2_ref, o_ref):
    # 2F <= 128: concat [C|T] in VMEM and run mlp1 as ONE K=2F MXU pass.
    ct = jnp.concatenate([c_ref[...], t_ref[...]], axis=-1)
    h = jnp.maximum(
        jnp.dot(ct, w1_ref[...], preferred_element_type=jnp.float32), 0.0)
    o_ref[...] = jnp.dot(
        h, w2_ref[...], preferred_element_type=jnp.float32).astype(o_ref.dtype)


def _fused_mlp_split_kernel(c_ref, t_ref, w1a_ref, w1b_ref, w2_ref, o_ref):
    # 2F > 128: [C|T] @ Wm1 == C @ Wm1[:F] + T @ Wm1[F:]  (no HBM concat).
    h = jnp.dot(c_ref[...], w1a_ref[...], preferred_element_type=jnp.float32)
    h = h + jnp.dot(t_ref[...], w1b_ref[...], preferred_element_type=jnp.float32)
    h = jnp.maximum(h, 0.0)
    o_ref[...] = jnp.dot(
        h, w2_ref[...], preferred_element_type=jnp.float32).astype(o_ref.dtype)


def _bmm_lanes_kernel(a_ref, b_ref, o_ref):
    # Channels-last blocks (N, N, fl): out[i,j,:] = sum_k a[i,k,:] * b[k,j,:].
    # VPU broadcast-MAC with F on the lane axis; N is small (<= 32), static
    # unroll over the contraction dim.
    n = a_ref.shape[1]
    acc = a_ref[:, 0:1, :] * b_ref[0:1, :, :]
    for k in range(1, n):
        acc = acc + a_ref[:, k:k + 1, :] * b_ref[k:k + 1, :, :]
    o_ref[...] = acc.astype(o_ref.dtype)


def _bmm_mxu_kernel(a_ref, b_ref, o_ref):
    # Channels-first blocks (fb, N, N): per-channel dense matmul on the MXU.
    o_ref[...] = jnp.einsum(
        "fik,fkj->fij", a_ref[...], b_ref[...],
        preferred_element_type=jnp.float32,
    ).astype(o_ref.dtype)


# ----------------------------------------------------------------------------
# pallas_call wrappers
# ----------------------------------------------------------------------------
def pallas_linear(x, w, max_tm=512):
    """(M, K) @ (K, N) -> (M, N), row-tiled over M, weight single-buffered."""
    M, K = x.shape
    K2, Ncols = w.shape
    assert K == K2

    w_bytes = 4 * K * Ncols                       # single-buffered
    row_bytes = 4 * (2 * K + 2 * Ncols)           # x / out double-buffered
    budget = max(_VMEM_LIMIT // 2 - w_bytes, 64 * 1024)
    tm_cap = max(8, (budget // row_bytes) // 8 * 8)
    tm = min(_round_up(max_tm, 8), tm_cap, _round_up(M, 8))
    tm = max(8, min(tm, _round_up(pl.cdiv(M, 2), 8)))   # >= 2 steps when possible
    Mp = _round_up(M, tm)
    xp = _pad_rows(x, Mp)

    out = pl.pallas_call(
        _linear_kernel,
        out_shape=jax.ShapeDtypeStruct((Mp, Ncols), jnp.float32),
        grid=(Mp // tm,),
        in_specs=[pl.BlockSpec((tm, K), lambda i: (i, 0)),
                  _const_spec((K, Ncols))],
        out_specs=pl.BlockSpec((tm, Ncols), lambda i: (i, 0)),
        compiler_params=pltpu.CompilerParams(
            dimension_semantics=("parallel",),
            vmem_limit_bytes=_VMEM_LIMIT),
        cost_estimate=pl.CostEstimate(
            flops=int(2 * Mp * K * Ncols),
            transcendentals=0,
            bytes_accessed=int(4 * (Mp * K + K * Ncols + Mp * Ncols))),
    )(xp, w)
    return out[:M]


def pallas_fused_mlp(C, T, Wm1, Wm2, max_tm=512):
    """relu(concat([C, T], 1) @ Wm1) @ Wm2, fully fused, row-tiled over edges."""
    E, F = C.shape
    twoF, H = Wm1.shape
    H2, Nout = Wm2.shape
    assert twoF == 2 * F and H2 == H and T.shape == (E, F)

    # Lane-dense output: zero-pad a narrow Wm2 to a 128-column multiple;
    # the extra (all-zero) columns are sliced off after this final kernel.
    Nout_p = _round_up(Nout, 128) if Nout < 128 else Nout
    Wm2p = jnp.pad(Wm2, ((0, 0), (0, Nout_p - Nout))) if Nout_p != Nout else Wm2

    packed = twoF <= 128

    # Row tile: C/T/out double-buffered + (tm, H) intermediate; weights are
    # single-buffered via pl.Buffered(1).
    w_bytes = 4 * (twoF * H + H * Nout_p)
    row_bytes = 4 * (4 * F + H + 2 * Nout_p)
    budget = max(_VMEM_LIMIT // 2 - w_bytes, 64 * 1024)
    tm_cap = max(8, (budget // row_bytes) // 8 * 8)
    tm = min(_round_up(max_tm, 8), tm_cap, _round_up(E, 8))
    tm = max(8, min(tm, _round_up(pl.cdiv(E, 2), 8)))   # >= 2 steps (v7x 2 TCs)
    Ep = _round_up(E, tm)
    Cp, Tp = _pad_rows(C, Ep), _pad_rows(T, Ep)

    row_spec = pl.BlockSpec((tm, F), lambda i: (i, 0))
    if packed:
        kernel = _fused_mlp_packed_kernel
        w_args = (Wm1, Wm2p)
        w_specs = [_const_spec((twoF, H)), _const_spec((H, Nout_p))]
    else:
        kernel = _fused_mlp_split_kernel
        w_args = (Wm1[:F], Wm1[F:], Wm2p)
        w_specs = [_const_spec((F, H)), _const_spec((F, H)),
                   _const_spec((H, Nout_p))]

    out = pl.pallas_call(
        kernel,
        out_shape=jax.ShapeDtypeStruct((Ep, Nout_p), jnp.float32),
        grid=(Ep // tm,),
        in_specs=[row_spec, row_spec] + w_specs,
        out_specs=pl.BlockSpec((tm, Nout_p), lambda i: (i, 0)),
        compiler_params=pltpu.CompilerParams(
            dimension_semantics=("parallel",),
            vmem_limit_bytes=_VMEM_LIMIT),
        cost_estimate=pl.CostEstimate(
            flops=int(2 * Ep * (twoF * H + H * Nout_p)),
            transcendentals=0,
            bytes_accessed=int(4 * (2 * Ep * F + twoF * H + H * Nout_p
                                    + Ep * Nout_p))),
    )(Cp, Tp, *w_args)
    return out[:E, :Nout]


def pallas_bmm_channels_last(a, b, max_fl=1024):
    """Small-N per-channel product with F on the lane axis (VPU path).

    a, b: (N, N, F) float32.  out[i,j,f] = sum_k a[i,k,f] * b[k,j,f].
    Channel (lane) axis is blocked; each (N, N, fl) block is one grid step.
    """
    N, N2, F = a.shape
    assert N == N2
    if F <= 128:
        fl, Fp = F, F
    else:
        nn_bytes = N * _round_up(N, 8) * 4          # per lane-column footprint
        budget = _VMEM_LIMIT // 2
        fl_cap = max(128, (budget // (6 * nn_bytes)) // 128 * 128)
        fl = min(_round_up(max_fl, 128), fl_cap, _round_up(F, 128))
        fl = max(128, min(fl, _round_up(pl.cdiv(F, 2), 128)))   # >= 2 steps
        Fp = _round_up(F, fl)
    if Fp != F:
        pad = ((0, 0), (0, 0), (0, Fp - F))
        a = jnp.pad(a, pad)
        b = jnp.pad(b, pad)

    out = pl.pallas_call(
        _bmm_lanes_kernel,
        out_shape=jax.ShapeDtypeStruct((N, N, Fp), jnp.float32),
        grid=(Fp // fl,),
        in_specs=[pl.BlockSpec((N, N, fl), lambda f: (0, 0, f)),
                  pl.BlockSpec((N, N, fl), lambda f: (0, 0, f))],
        out_specs=pl.BlockSpec((N, N, fl), lambda f: (0, 0, f)),
        compiler_params=pltpu.CompilerParams(
            dimension_semantics=("parallel",),
            vmem_limit_bytes=_VMEM_LIMIT),
        cost_estimate=pl.CostEstimate(
            flops=int(2 * N * N * N * Fp),
            transcendentals=0,
            bytes_accessed=int(3 * N * N * Fp * 4)),
    )(a, b)
    return out[:, :, :F] if Fp != F else out


def pallas_bmm_channels_first(a, b, max_fb=256):
    """Large-N per-channel dense matmul (MXU path): (F,N,N)@(F,N,N)->(F,N,N).

    A block of fb channels is processed per grid step; fb is sized from the
    PADDED (8,128) VMEM footprint and clamped so the grid has >= 2 steps.
    """
    F, N, _ = a.shape
    per_ch_bytes = _round_up(N, 8) * _round_up(N, 128) * 4   # padded footprint
    budget = max(8 << 20, _VMEM_LIMIT // 3)
    fb = max(1, min(F, max_fb, budget // (6 * per_ch_bytes)))
    if F >= 2:
        fb = max(1, min(fb, pl.cdiv(F, 2)))                  # >= 2 grid steps
    Fp = _round_up(F, fb)
    if Fp != F:
        pad = ((0, Fp - F), (0, 0), (0, 0))
        a = jnp.pad(a, pad)
        b = jnp.pad(b, pad)

    out = pl.pallas_call(
        _bmm_mxu_kernel,
        out_shape=jax.ShapeDtypeStruct((Fp, N, N), jnp.float32),
        grid=(Fp // fb,),
        in_specs=[pl.BlockSpec((fb, N, N), lambda f: (f, 0, 0)),
                  pl.BlockSpec((fb, N, N), lambda f: (f, 0, 0))],
        out_specs=pl.BlockSpec((fb, N, N), lambda f: (f, 0, 0)),
        compiler_params=pltpu.CompilerParams(
            dimension_semantics=("parallel",),
            vmem_limit_bytes=_VMEM_LIMIT),
        cost_estimate=pl.CostEstimate(
            flops=int(2 * Fp * N * N * N),
            transcendentals=0,
            bytes_accessed=int(3 * Fp * N * N * 4)),
    )(a, b)
    return out[:F]


# ----------------------------------------------------------------------------
# parameters + forward
# ----------------------------------------------------------------------------
def init_params(key, nedgeinput, nedgeoutput):
    """Deterministic init matching torch.nn.Linear shapes (bias=False)."""
    k1, k2, k3, k4 = jax.random.split(key, 4)

    def lin(k, fan_in, fan_out):
        bound = 1.0 / math.sqrt(fan_in)
        # stored as (in, out) so forward is x @ W  (== torch's x @ weight.T)
        return jax.random.uniform(k, (fan_in, fan_out), jnp.float32, -bound, bound)

    return {
        "W1": lin(k1, nedgeinput, nedgeinput),           # L1
        "W2": lin(k2, nedgeinput, nedgeinput),           # L2
        "Wm1": lin(k3, 2 * nedgeinput, 8 * nedgeinput),  # mlp1
        "Wm2": lin(k4, 8 * nedgeinput, nedgeoutput),     # mlp2
    }


def ppgn_layer_forward(params, edge_index, C, batch_node, max_tm=512,
                       bmm_impl="auto"):
    """Semantics of PPGNLayer.forward(edge_index, C, batch_node)."""
    E, F = C.shape
    N = batch_node.shape[0]
    ei0, ei1 = edge_index[0], edge_index[1]

    # L1(C) and L2(C) in a single fused Pallas matmul.  The packed W1|W2 is
    # zero-padded to >= 128 output columns when narrow (lane-dense stores).
    W12 = jnp.concatenate([params["W1"], params["W2"]], axis=1)   # (F, 2F)
    twoF = 2 * F
    cols_p = _round_up(twoF, 128) if twoF < 128 else twoF
    if cols_p != twoF:
        W12 = jnp.pad(W12, ((0, 0), (0, cols_p - twoF)))
    XY = pallas_linear(C, W12, max_tm=max_tm)                     # (E, cols_p)
    X, Y = XY[:, :F], XY[:, F:twoF]

    use_vpu = bmm_impl == "vpu" or (bmm_impl == "auto" and N <= 32)
    if use_vpu:
        # Channels-last layout: the edge scatter/gather is layout-natural
        # (no transposes) and the per-channel products run on the VPU with the
        # feature axis on lanes — small N x N matmuls would badly under-fill
        # the MXU and pay 16x (8,128) padding per channel.
        resx = jnp.zeros((N, N, F), jnp.float32).at[ei0, ei1].set(X)
        resy = jnp.zeros((N, N, F), jnp.float32).at[ei0, ei1].set(Y)
        res = pallas_bmm_channels_last(resx, resy)                # (N, N, F)
        tmp_matmul = res[ei0, ei1]                                # (E, F)
    else:
        # Channels-first layout: per-channel (N, N) matmuls on the MXU.
        # TODO(synk): fuse the scatter/gather + transposes into the bmm kernel
        #             via PrefetchScalarGridSpec (edge_index in SMEM) to drop
        #             the (F, N, N) HBM round trips for large graphs.
        resx = jnp.zeros((F, N, N), jnp.float32).at[:, ei0, ei1].set(X.T)
        resy = jnp.zeros((F, N, N), jnp.float32).at[:, ei0, ei1].set(Y.T)
        res = pallas_bmm_channels_first(resx, resy)               # (F, N, N)
        tmp_matmul = res[:, ei0, ei1].T                           # (E, F)

    # Fused concat + mlp1 + ReLU + mlp2 (single K=2F pass when 2F <= 128).
    return pallas_fused_mlp(C, tmp_matmul, params["Wm1"], params["Wm2"],
                            max_tm=max_tm)                        # (E, nedgeoutput)


def ppgn_layer_reference(params, edge_index, C, batch_node):
    """Pure-jnp reference for a correctness check."""
    ei0, ei1 = edge_index[0], edge_index[1]
    E, F = C.shape
    N = batch_node.shape[0]
    X = C @ params["W1"]
    Y = C @ params["W2"]
    resx = jnp.zeros((F, N, N), jnp.float32).at[:, ei0, ei1].set(X.T)
    resy = jnp.zeros((F, N, N), jnp.float32).at[:, ei0, ei1].set(Y.T)
    res = jnp.einsum("fik,fkj->fij", resx, resy)
    tmp_matmul = res[:, ei0, ei1].T
    tmp = jnp.concatenate([C, tmp_matmul], axis=1)
    h = jnp.maximum(tmp @ params["Wm1"], 0.0)
    return h @ params["Wm2"]


if __name__ == "__main__":
    nedgeinput = 8
    nedgeoutput = 8
    n_nodes = 8

    key = jax.random.PRNGKey(0)
    kp, kc = jax.random.split(key)
    params = init_params(kp, nedgeinput, nedgeoutput)

    # simple deterministic graph: ring + 2 skip families; keep 20 edges so the
    # row-padding path is exercised (20 is not 8-aligned).
    src = jnp.concatenate([jnp.arange(n_nodes)] * 3)
    dst = jnp.concatenate([(jnp.arange(n_nodes) + 1) % n_nodes,
                           (jnp.arange(n_nodes) + 2) % n_nodes,
                           (jnp.arange(n_nodes) + 3) % n_nodes])
    edge_index = jnp.stack([src, dst]).astype(jnp.int32)[:, :20]   # (2, E), E=20
    E = edge_index.shape[1]

    C = jax.random.normal(kc, (E, nedgeinput), jnp.float32)   # edge features
    batch_node = jnp.zeros((n_nodes,), jnp.float32)           # only length matters

    ref = ppgn_layer_reference(params, edge_index, C, batch_node)

    # default path: small N -> channels-last VPU bmm; max_tm=8 exercises the
    # multi-tile row grids + padding at demo scale (production default 512).
    out_vpu = ppgn_layer_forward(params, edge_index, C, batch_node, max_tm=8)
    out_vpu = jax.block_until_ready(out_vpu)
    assert out_vpu.shape == (E, nedgeoutput)
    assert jnp.allclose(out_vpu, ref, atol=1e-4, rtol=1e-4), float(
        jnp.max(jnp.abs(out_vpu - ref)))

    # forced channels-first MXU bmm path (the one used for larger graphs).
    out_mxu = ppgn_layer_forward(params, edge_index, C, batch_node,
                                 max_tm=512, bmm_impl="mxu")
    out_mxu = jax.block_until_ready(out_mxu)
    assert jnp.allclose(out_mxu, ref, atol=1e-4, rtol=1e-4), float(
        jnp.max(jnp.abs(out_mxu - ref)))

    print("KERNEL_OK")
</pallas_src>

<mosaic_0001>
module attributes {stable_mosaic.version = 11 : i64} {
  func.func @_linear_kernel(%arg0: i32, %arg1: memref<8x8xf32, #tpu.memory_space<vmem>>, %arg2: memref<8x128xf32, #tpu.memory_space<vmem>>, %arg3: memref<8x128xf32, #tpu.memory_space<vmem>>) attributes {dimension_semantics = [#tpu.dimension_semantics<parallel>], iteration_bounds = array<i64: 3>, scalar_prefetch = 0 : i64, scratch_operands = 0 : i64, tpu.core_type = #tpu.core_type<tc>, window_params = [{transform_indices = @transform_0, window_bounds = array<i64: 8, 8>}, {pipeline_mode = #tpu.pipeline_mode<synchronous>, transform_indices = @transform_1, window_bounds = array<i64: 8, 128>}, {transform_indices = @transform_2, window_bounds = array<i64: 8, 128>}]} {
    %c0 = arith.constant 0 : index
    %c0_0 = arith.constant 0 : index
    %0 = vector.load %arg1[%c0, %c0_0] : memref<8x8xf32, #tpu.memory_space<vmem>>, vector<8x8xf32>
    %c0_1 = arith.constant 0 : index
    %c0_2 = arith.constant 0 : index
    %1 = vector.load %arg2[%c0_1, %c0_2] : memref<8x128xf32, #tpu.memory_space<vmem>>, vector<8x128xf32>
    %cst = arith.constant dense<0.000000e+00> : vector<8x128xf32>
    %2 = tpu.matmul %0, %1, %cst {dimension_numbers = #tpu.dot_dimension_numbers<[1], [0], [0], [1], [0, 0, 1, 1], [], []>} : vector<8x8xf32>, vector<8x128xf32>, vector<8x128xf32> -> vector<8x128xf32>
    %c0_3 = arith.constant 0 : index
    %c0_4 = arith.constant 0 : index
    %3 = vector.load %arg3[%c0_3, %c0_4] : memref<8x128xf32, #tpu.memory_space<vmem>>, vector<8x128xf32>
    tpu.vector_store %arg3[%c0_3, %c0_4], %2 {strides = array<i32>} : memref<8x128xf32, #tpu.memory_space<vmem>>, vector<8x128xf32>,
    return
  }
  func.func @transform_0(%arg0: i32) -> (i32, i32) {
    %c0_i32 = arith.constant 0 : i32
    %c0_i32_0 = arith.constant 0 : i32
    return %arg0, %c0_i32 : i32, i32
  }
  func.func @transform_1(%arg0: i32) -> (i32, i32) {
    %c0_i32 = arith.constant 0 : i32
    %c0_i32_0 = arith.constant 0 : i32
    %c0_i32_1 = arith.constant 0 : i32
    return %c0_i32, %c0_i32_0 : i32, i32
  }
  func.func @transform_2(%arg0: i32) -> (i32, i32) {
    %c0_i32 = arith.constant 0 : i32
    %c0_i32_0 = arith.constant 0 : i32
    return %arg0, %c0_i32 : i32, i32
  }
}

</mosaic_0001>

<llo_original>
// kernel: tpu_custom_call.1
$region0: #{tpu_custom_call.1}
  #allocation0 [shape = 'u32[]', space=smem, size = 0x4, offset = 0x4, fixed_abs, tag = 'smem constant byte address 0x4 - core index']
  #allocation1 [shape = 'u32[144,128]{1,0:T(1,128)}', space=vmem, size = 0x12000, scoped, tag = 'internal scratch']
  %s0 = inlined_call_operand.vmem [shape: f32[24,8], index: 0, kind: input, shape index: {}]
  %s1 = inlined_call_operand.vmem [shape: f32[8,128], index: 1, kind: input, shape index: {}]
  %s2 = inlined_call_operand.hbm [shape: f32[24,128], index: 2, kind: output, shape index: {}]
  %s3 = sld [smem:[#allocation0]]
  $region41: #{tpu_custom_call.1} parent=0
    _
  %s5 = ssub.s32 1, %s3
  %s6 = scalar_select 0, %s5, %s3
  $region1: #{tpu_custom_call.1} parent=0
    #allocation2 [shape = 'u8[8192]{0}', space=vmem, size = 0x2000, scoped, tag = 'output window, operand 0']
    #allocation3 [shape = 's32[2]{0}', space=sflag, size = 0x8, scoped, tag = 'scoped memory for tpu_custom_call.1']
    %7 = vsyncpa [#allocation3], 0
    %s8 = scalar_lea.sflag [#allocation3], 1
    %9 = vsyncpa %s8, 0
    loop: start=0, step=1, limit=5
    $region2: #{tpu_custom_call.1} parent=1 // loop_pre_header
      _
    $region3: #{tpu_custom_call.1} parent=1 // loop_header
      %s11 = sphi 0, %s15
      %p12 = scmp.ge.s32.totalorder %s11, 5
      %s21 = sphi 0, %s23
      %s24 = sphi 0, %s21
      %s25 = sphi 0, %s24
      %s41 = sphi 0, %s25
      %s45 = sphi 0, %s45
      %s47 = sphi 0, %s45
      %s48 = sphi 0, %s47
      %s62 = sphi 0, %s48
      %s68 = sphi 0, %s70
      %s71 = sphi 0, %s68
      %s72 = sphi 0, %s71
      %s88 = sphi 0, %s72
    $region4: #{tpu_custom_call.1} parent=1 // loop_header_branch
      %14 = sbr.rel (%p12) target = $region8
    $region5: #{tpu_custom_call.1} parent=1 // loop_body
      %s16 = ssub.s32 %s11, 1
      %s17 = ssub.s32 %s11, 2
      %s18 = sadd.s32 %s11, 1
      %s19 = ssub.s32 %s11, %s18
      %p20 = scmp.eq.s32.totalorder %s19, 0
      %s22 = sadd.s32 %s21, 1
      %s23 = scalar_select %p20, %s21, %s22
      %p26 = pneg %p20
      %p27 = scmp.eq.s32.totalorder %s11, 2
      %p28 = por %p26, %p27
      %p29 = scmp.ne.s32.totalorder %s21, %s24
      %p30 = scmp.eq.s32.totalorder %s11, 0
      %p31 = por %p29, %p30
      %p32 = scmp.ne.s32.totalorder %s21, %s24
      %p33 = scmp.eq.s32.totalorder %s16, 2
      %p34 = por %p32, %p33
      %p35 = scmp.ne.s32.totalorder %s24, %s25
      %p36 = scmp.eq.s32.totalorder %s16, 0
      %p37 = por %p35, %p36
      %p38 = scmp.ne.s32.totalorder %s24, %s25
      %p39 = scmp.eq.s32.totalorder %s17, 2
      %p40 = por %p38, %p39
      %p42 = scmp.ne.s32.totalorder %s25, %s41
      %p43 = scmp.eq.s32.totalorder %s17, 0
      %p44 = por %p42, %p43
      %s46 = sadd.s32 %s45, 1
      %p49 = scmp.eq.s32.totalorder %s11, 2
      %p50 = scmp.ne.s32.totalorder %s45, %s47
      %p51 = scmp.eq.s32.totalorder %s11, 0
      %p52 = por %p50, %p51
      %p53 = scmp.ne.s32.totalorder %s45, %s47
      %p54 = scmp.eq.s32.totalorder %s16, 2
      %p55 = por %p53, %p54
      %p56 = scmp.ne.s32.totalorder %s47, %s48
      %p57 = scmp.eq.s32.totalorder %s16, 0
      %p58 = por %p56, %p57
      %p59 = scmp.ne.s32.totalorder %s47, %s48
      %p60 = scmp.eq.s32.totalorder %s17, 2
      %p61 = por %p59, %p60
      %p63 = scmp.ne.s32.totalorder %s48, %s62
      %p64 = scmp.eq.s32.totalorder %s17, 0
      %p65 = por %p63, %p64
      %s66 = ssub.s32 %s11, %s18
      %p67 = scmp.eq.s32.totalorder %s66, 0
      %s69 = sadd.s32 %s68, 1
      %s70 = scalar_select %p67, %s68, %s69
      %p73 = pneg %p67
      %p74 = scmp.eq.s32.totalorder %s11, 2
      %p75 = por %p73, %p74
      %p76 = scmp.ne.s32.totalorder %s68, %s71
      %p77 = scmp.eq.s32.totalorder %s11, 0
      %p78 = por %p76, %p77
      %p79 = scmp.ne.s32.totalorder %s68, %s71
      %p80 = scmp.eq.s32.totalorder %s16, 2
      %p81 = por %p79, %p80
      %p82 = scmp.ne.s32.totalorder %s71, %s72
      %p83 = scmp.eq.s32.totalorder %s16, 0
      %p84 = por %p82, %p83
      %p85 = scmp.ne.s32.totalorder %s71, %s72
      %p86 = scmp.eq.s32.totalorder %s17, 2
      %p87 = por %p85, %p86
      %p89 = scmp.ne.s32.totalorder %s72, %s88
      %p90 = scmp.eq.s32.totalorder %s17, 0
      %p91 = por %p89, %p90
      %p92 = scmp.le.s32.totalorder 1, %s11
      %p93 = scmp.lt.s32.totalorder %s11, 4
      %p94 = pnand %p92, %p93
      %p95 = pneg %p94
      // Predicated region
      $region9: #{tpu_custom_call.1} parent=5 // pred_check
        _
      $region10: #{tpu_custom_call.1} parent=5 // pred_check_branch
        %97 = sbr.rel (%p94) target = $region12
      $region11: #{tpu_custom_call.1} parent=5 // pred_region
        %s98 = ssub.s32 %s11, 1
        // Predicated region
        $region13: #{tpu_custom_call.1} parent=11 // pred_check
          %p99 = pneg %p58
        $region14: #{tpu_custom_call.1} parent=11 // pred_check_branch
          %101 = sbr.rel (%p99) target = $region16
        $region15: #{tpu_custom_call.1} parent=11 // pred_region
          _
        $region16: #{tpu_custom_call.1} parent=11 // pred_fallthru
          _
      $region12: #{tpu_custom_call.1} parent=5 // pred_fallthru
        _
      %p102 = scmp.lt.s32.totalorder %s11, 3
      // Predicated region
      $region17: #{tpu_custom_call.1} parent=5 // pred_check
        %p103 = pneg %p102
      $region18: #{tpu_custom_call.1} parent=5 // pred_check_branch
        %105 = sbr.rel (%p103) target = $region20
      $region19: #{tpu_custom_call.1} parent=5 // pred_region
        // Predicated region
        $region21: #{tpu_custom_call.1} parent=19 // pred_check
          %p106 = pneg %p31
        $region22: #{tpu_custom_call.1} parent=19 // pred_check_branch
          %108 = sbr.rel (%p106) target = $region24
        $region23: #{tpu_custom_call.1} parent=19 // pred_region
          %p109 = scmp.lt.s32.totalorder %s11, 2
          %s110 = scalar_select %p109, %s11, 2
          %s111 = smul.addr %s110, 8
          %s112 = scalar_lea.vmem %s0, %s111
        $region24: #{tpu_custom_call.1} parent=19 // pred_fallthru
          _
      $region20: #{tpu_custom_call.1} parent=5 // pred_fallthru
        _
      %p113 = scmp.le.s32.totalorder 1, %s11
      %p114 = scmp.lt.s32.totalorder %s11, 4
      %p115 = pnand %p113, %p114
      %p116 = pneg %p115
      // Predicated region
      $region25: #{tpu_custom_call.1} parent=5 // pred_check
        _
      $region26: #{tpu_custom_call.1} parent=5 // pred_check_branch
        %118 = sbr.rel (%p115) target = $region28
      $region27: #{tpu_custom_call.1} parent=5 // pred_region
        %s119 = ssub.s32 %s11, 1
        %p120 = scmp.lt.s32.totalorder %s16, 2
        %s121 = scalar_select %p120, %s16, 2
        %s122 = smul.addr %s121, 8
        %s123 = scalar_lea.vmem %s0, %s122
        %p124 = pneg %p37
        %p125 = pneg %p34
        %p126 = pneg %p58
        %p127 = pneg %p55
        %p128 = pneg %p84
        %p129 = pneg %p81
        %s130 = sand.u32 %s71, 1
        %s131 = scalar_lea.sflag [#allocation3], %s130
        %s132 = sand.u32 %s71, 1
        %s133 = smul.addr %s132, 8
        %s134 = scalar_lea.vmem [#allocation2], %s133
        %p135 = scmp.lt.s32.totalorder %s16, 2
        %s136 = scalar_select %p135, %s16, 2
        %s137 = smul.addr %s136, 8
        %s138 = scalar_lea.vmem %s0, %s137
        %v139 = vld [vmem:[%s138] sm:$0xff]
        %v140 = vld [vmem:[%s1] sm:$0xff]
        %vm141 = vcmask 64512
        %v143 = vsel %vm141, %v139, 0
        %145 = vmatprep.subr.mxu0 0.0
        %146 = vmatpush1.msra.mxu0 0.0
        %147 = vmatprep.subr.mxu0 0.0
        %148 = vmatpush1.msra.mxu0 0.0
        %149 = vmatprep.subr.mxu0 0.0
        %150 = vmatpush1.msra.mxu0 0.0
        %151 = vmatprep.subr.mxu0 0.0
        %152 = vmatpush1.msra.mxu0 0.0
        %153 = vmatprep.subr.mxu0 0.0
        %154 = vmatpush1.msra.mxu0 0.0
        %155 = vmatprep.subr.mxu0 0.0
        %156 = vmatpush1.msra.mxu0 0.0
        %157 = vmatprep.subr.mxu0 0.0
        %158 = vmatpush1.msra.mxu0 0.0
        %159 = vmatprep.subr.mxu0 0.0
        %160 = vmatpush1.msra.mxu0 0.0
        %161 = vmatprep.subr.mxu0 0.0
        %162 = vmatpush1.msra.mxu0 0.0
        %163 = vmatprep.subr.mxu0 0.0
        %164 = vmatpush1.msra.mxu0 0.0
        %165 = vmatprep.subr.mxu0 0.0
        %166 = vmatpush1.msra.mxu0 0.0
        %167 = vmatprep.subr.mxu0 0.0
        %168 = vmatpush1.msra.mxu0 0.0
        %169 = vmatprep.subr.mxu0 0.0
        %170 = vmatpush1.msra.mxu0 0.0
        %171 = vmatprep.subr.mxu0 0.0
        %172 = vmatpush1.msra.mxu0 0.0
        %173 = vmatprep.subr.mxu0 0.0
        %174 = vmatpush1.msra.mxu0 0.0
        %175 = vmatprep.subr.mxu0 0.0
        %176 = vmatpush1.msra.mxu0 %v140
        %177 = vmatprep.subr.mxu0 0.0
        %178 = vmatpush2.msra.mxu0 0.0
        %179 = vmatprep.subr.mxu0 0.0
        %180 = vmatpush2.msra.mxu0 0.0
        %181 = vmatprep.subr.mxu0 0.0
        %182 = vmatpush2.msra.mxu0 0.0
        %183 = vmatprep.subr.mxu0 0.0
        %184 = vmatpush2.msra.mxu0 0.0
        %185 = vmatprep.subr.mxu0 0.0
        %186 = vmatpush2.msra.mxu0 0.0
        %187 = vmatprep.subr.mxu0 0.0
        %188 = vmatpush2.msra.mxu0 0.0
        %189 = vmatprep.subr.mxu0 0.0
        %190 = vmatpush2.msra.mxu0 0.0
        %191 = vmatprep.subr.mxu0 0.0
        %192 = vmatpush2.msra.mxu0 0.0
        %193 = vmatprep.subr.mxu0 0.0
        %194 = vmatpush2.msra.mxu0 0.0
        %195 = vmatprep.subr.mxu0 0.0
        %196 = vmatpush2.msra.mxu0 0.0
        %197 = vmatprep.subr.mxu0 0.0
        %198 = vmatpush2.msra.mxu0 0.0
        %199 = vmatprep.subr.mxu0 0.0
        %200 = vmatpush2.msra.mxu0 0.0
        %201 = vmatprep.subr.mxu0 0.0
        %202 = vmatpush2.msra.mxu0 0.0
        %203 = vmatprep.subr.mxu0 0.0
        %204 = vmatpush2.msra.mxu0 0.0
        %205 = vmatprep.subr.mxu0 0.0
        %206 = vmatpush2.msra.mxu0 0.0
        %207 = vmatprep.subr.mxu0 0.0
        %208 = vmatpush2.msra.mxu0 0.0
        %209 = vmatprep.mubr.f32.mxu0 0.0
        %210 = vmatmul.mubr.f32.gmra.mxu0 %v143
        %v211 = vpop.f32.mrf.mxu0
        %v212 = vadd.f32 0.0, %v211
        %v213 = vpop.f32.mrf.mxu0
        %214 = vdwg.mxu0
        %215 = vst [vmem:[%s134] sm:$0xff] %v212
        %s216 = sand.u32 %s71, 1
        %s217 = scalar_lea.sflag [#allocation3], %s216
        %s218 = sand.u32 %s71, 1
        %s219 = smul.addr %s218, 8
        %s220 = scalar_lea.vmem [#allocation2], %s219
        // Predicated region
        $region29: #{tpu_custom_call.1} parent=27 // pred_check
          %p221 = pneg %p81
        $region30: #{tpu_custom_call.1} parent=27 // pred_check_branch
          %223 = sbr.rel (%p221) target = $region32
        $region31: #{tpu_custom_call.1} parent=27 // pred_region
          %s225 = ssub.s32 128, 128
          %226 = vsyncadd %s217, %s225
          %s227 = smul.addr %s16, 128
          %s228 = scalar_lea.hbm %s2, %s227
          %s230 = sshll.u32 %s220, 4
          %s231 = int_to_ptr.vmem [resolvable:$true] %s230
          %233 = dma.vmem_to_hbm [thread:$0]  %s231, 128, %s228, %s217
        $region32: #{tpu_custom_call.1} parent=27 // pred_fallthru
          _
      $region28: #{tpu_custom_call.1} parent=5 // pred_fallthru
        _
      %p234 = scmp.le.s32.totalorder 2, %s11
      // Predicated region
      $region33: #{tpu_custom_call.1} parent=5 // pred_check
        %p235 = pneg %p234
      $region34: #{tpu_custom_call.1} parent=5 // pred_check_branch
        %237 = sbr.rel (%p235) target = $region36
      $region35: #{tpu_custom_call.1} parent=5 // pred_region
        %s238 = ssub.s32 %s11, 2
        // Predicated region
        $region37: #{tpu_custom_call.1} parent=35 // pred_check
          %p239 = pneg %p87
        $region38: #{tpu_custom_call.1} parent=35 // pred_check_branch
          %241 = sbr.rel (%p239) target = $region40
        $region39: #{tpu_custom_call.1} parent=35 // pred_region
          %s242 = sand.u32 %s72, 1
          %s243 = scalar_lea.sflag [#allocation3], %s242
          %s244 = sand.u32 %s72, 1
          %s245 = smul.addr %s244, 8
          %s246 = scalar_lea.vmem [#allocation2], %s245
          %247 = dma.done %s243, 128
        $region40: #{tpu_custom_call.1} parent=35 // pred_fallthru
          _
      $region36: #{tpu_custom_call.1} parent=5 // pred_fallthru
        _
    $region6: #{tpu_custom_call.1} parent=1 // loop_footer
      %s15 = sadd.s32 1, %s11
    $region7: #{tpu_custom_call.1} parent=1 // loop_footer_branch
      %10 = sbr.rel target = $region3
    $region8: #{tpu_custom_call.1} parent=1 // loop_exit
      _
    %248 = vsyncpa [#allocation3], 1
    %s249 = scalar_lea.sflag [#allocation3], 1
    %250 = vsyncpa %s249, 1

</llo_original>
